<compile_context>
chip_gen: v7x
topology: tpu7x:2x2x1
jax: 0.10.0
libtpu: 0.0.40
codegen_flags: <defaults>
</compile_context>

<pallas_src>
import functools

import numpy as np
import jax
import jax.numpy as jnp
from jax.experimental import pallas as pl
from jax.experimental.pallas import tpu as pltpu

_VMEM_LIMIT = 48 * 1024 * 1024  # safe on v5e/v6e (128 MiB phys) and v7x (64 MiB)

# PyTorch LSTM gate order is [i, f, g, o]; we reorder columns to [i, f, o, g]
# so all three sigmoid gates are one contiguous lane-aligned slice.
_GATE_PERM = (0, 1, 3, 2)


def _round_up(x, m):
    return (x + m - 1) // m * m


def _pad_reorder_gate_cols(w, h, h_pad):
    """(in_dim, 4*h) PyTorch order [i|f|g|o] -> (in_dim, 4*h_pad) order [i|f|o|g]."""
    in_dim = w.shape[0]
    w4 = w.reshape(in_dim, 4, h)[:, _GATE_PERM, :]
    w4 = jnp.pad(w4, ((0, 0), (0, 0), (0, h_pad - h)))
    return w4.reshape(in_dim, 4 * h_pad)


# ---------------------------------------------------------------------------
# Kernel 1: time-parallel projection  gates_in = relu(LN(x) @ Wf' + bf') @ Wih
# (LayerNorm affine already folded into Wf'/bf' host-side.)
# ---------------------------------------------------------------------------
def _proj_kernel(x_ref, wf_ref, bf_ref, wih_ref, g_ref):
    x = x_ref[...].astype(jnp.float32)                     # (R_BLK, D)
    # LayerNorm statistics only (eps = 1e-5, PyTorch default), f32.
    mu = jnp.mean(x, axis=-1, keepdims=True)
    var = jnp.mean((x - mu) ** 2, axis=-1, keepdims=True)
    xn = (x - mu) * jax.lax.rsqrt(var + 1e-5)

    # Fusion Linear (+ folded LN affine) + ReLU.  bf16 MXU operands, f32 acc.
    fused = jnp.dot(xn.astype(jnp.bfloat16), wf_ref[...],
                    preferred_element_type=jnp.float32)
    fused = jnp.maximum(fused + bf_ref[...], 0.0)          # (R_BLK, I)

    # Input projection of the LSTM gates; stored bf16 (halves HBM traffic).
    g_ref[...] = jnp.dot(fused.astype(jnp.bfloat16), wih_ref[...],
                         preferred_element_type=jnp.float32).astype(g_ref.dtype)


# ---------------------------------------------------------------------------
# Kernel 2: the sequential LSTM recurrence (only h @ W_hh + gate math / step)
# ---------------------------------------------------------------------------
def _recurrence_kernel(len_ref, gates_ref, w_hh_hbm, out_ref,
                       h_scr, c_scr, w_scr, dma_sem, *, t_blk, h_pad):
    tb = pl.program_id(1)

    @pl.when(tb == 0)
    def _start():
        # New batch block: fetch W_hh ONCE into single-buffered VMEM scratch
        # (it never changes) and zero the recurrent state.
        pltpu.make_async_copy(w_hh_hbm, w_scr, dma_sem.at[0]).start()
        h_scr[...] = jnp.zeros_like(h_scr)
        c_scr[...] = jnp.zeros_like(c_scr)

    # Issue the cheap loads before waiting on the W_hh DMA so they hide
    # part of the one-time fetch.
    lens = len_ref[...]                                    # (B_BLK, 1) int32
    h = h_scr[...]                                         # (B_BLK, H_pad) f32
    c = c_scr[...]
    t0 = tb * t_blk

    @pl.when(tb == 0)
    def _wait():
        pltpu.make_async_copy(w_hh_hbm, w_scr, dma_sem.at[0]).wait()

    # Statically unrolled chunk of the recurrence.  All gate slices are
    # lane-aligned (h_pad multiple of 128); the output store is lane-dense.
    for step in range(t_blk):
        gates = gates_ref[:, step].astype(jnp.float32) + jnp.dot(
            h.astype(jnp.bfloat16), w_scr[...],
            preferred_element_type=jnp.float32)            # (B_BLK, 4*H_pad)
        # Gate order [i|f|o|g]; sigmoid(x) = 0.5*tanh(0.5*x)+0.5 -> one EUP
        # push covers all three sigmoid gates (cuts per-step EUP pressure).
        sig = 0.5 * jnp.tanh(0.5 * gates[:, :3 * h_pad]) + 0.5
        i_g = sig[:, 0 * h_pad:1 * h_pad]
        f_g = sig[:, 1 * h_pad:2 * h_pad]
        o_g = sig[:, 2 * h_pad:3 * h_pad]
        g_g = jnp.tanh(gates[:, 3 * h_pad:])
        c = f_g * c + i_g * g_g
        h = o_g * jnp.tanh(c)
        # packed-sequence semantics: padded positions (t >= length) are zero.
        out_ref[:, step] = jnp.where(t0 + step < lens, h, 0.0).astype(out_ref.dtype)

    h_scr[...] = h
    c_scr[...] = c


# ---------------------------------------------------------------------------
# Wrapper
# ---------------------------------------------------------------------------
def lstm_stepwise_fusion(driven, lengths, params, *, max_len=None, t_blk=16):
    """driven: (B, T, D) f32, lengths: (B,) int. Returns (B, max_len, H) f32.

    Pass `max_len` as a static Python int when wrapping in jax.jit; if None it
    is computed host-side from `lengths` (fails/blocks on traced values).
    """
    B, T, D = driven.shape
    H = params["w_hh"].shape[0]
    I = params["w_fusion"].shape[1]

    if max_len is None:
        max_len = int(np.max(np.asarray(lengths)))   # host-side, never traced
    max_len = min(int(max_len), T)

    t_blk = max(8, (int(t_blk) // 8) * 8)  # keep sublane-aligned step block
    H_pad = _round_up(H, 128)              # lane-aligned gates & output store
    G = 4 * H_pad
    B_pad = _round_up(B, 8)                # sublane quantum (f32)
    T_pad = _round_up(max_len, t_blk)      # grid bounded at max(lengths)

    # Megacore batch split only pays once the per-core batch is large enough
    # to be throughput-bound (review: ~0 win at small batch, 2x W_hh fetches).
    nb = 2 if (B_pad % 16 == 0 and B_pad >= 512) else 1
    b_blk = B_pad // nb

    # ---- layout plumbing: stay batch-major, just pad ------------------------
    x_pad = jnp.pad(driven[:, :max_len],
                    ((0, B_pad - B), (0, T_pad - max_len), (0, 0)))
    rows = B_pad * T_pad
    x_flat = x_pad.reshape(rows, D)        # free metadata reshape (contiguous)

    # Fold the LayerNorm affine into the fusion weights (host-side, f32).
    ln_w = params["ln_w"].reshape(1, D)
    ln_b = params["ln_b"].reshape(1, D)
    w_fused = (ln_w.reshape(D, 1) * params["w_fusion"]).astype(jnp.bfloat16)   # (D, I)
    b_fused = (ln_b @ params["w_fusion"] + params["b_fusion"]).astype(jnp.float32)  # (1, I)

    w_ih = _pad_reorder_gate_cols(params["w_ih"], H, H_pad).astype(jnp.bfloat16)
    w_hh = jnp.pad(_pad_reorder_gate_cols(params["w_hh"], H, H_pad),
                   ((0, H_pad - H), (0, 0))).astype(jnp.bfloat16)   # (H_pad, G)

    lens_pad = jnp.zeros((B_pad, 1), jnp.int32).at[:B, 0].set(
        lengths.astype(jnp.int32))

    # ---- r_blk: biggest row tile that divides rows AND fits the VMEM budget.
    # rows is always a multiple of 8 (B_pad % 8 == 0), so r_blk=8 always works.
    def _proj_footprint(rb):   # 2x-buffered input/output blocks + weights
        return 2 * rb * (4 * D + 2 * G) + 4 * (D * I + I * G) + 8 * I + 4096

    budget = 12 * 1024 * 1024  # keeps the proj pipeline under v5e's default too
    r_blk = 8
    for cand in (1024, 512, 256, 128, 64, 32, 16, 8):
        if rows % cand == 0 and _proj_footprint(cand) <= budget:
            r_blk = cand
            break

    # ---- 1) time-parallel projection: one big well-shaped matmul ------------
    gates_flat = pl.pallas_call(
        _proj_kernel,
        out_shape=jax.ShapeDtypeStruct((rows, G), jnp.bfloat16),
        grid_spec=pltpu.PrefetchScalarGridSpec(
            num_scalar_prefetch=0,
            grid=(rows // r_blk,),
            in_specs=[
                pl.BlockSpec((r_blk, D), lambda r: (r, 0)),   # rows of driven
                pl.BlockSpec((D, I), lambda r: (0, 0)),       # W_fusion' (bf16)
                pl.BlockSpec((1, I), lambda r: (0, 0)),       # b_fusion' (f32)
                pl.BlockSpec((I, G), lambda r: (0, 0)),       # W_ih^T (bf16)
            ],
            out_specs=pl.BlockSpec((r_blk, G), lambda r: (r, 0))),
        compiler_params=pltpu.CompilerParams(
            dimension_semantics=("parallel",),
            vmem_limit_bytes=_VMEM_LIMIT),
    )(x_flat, w_fused, b_fused, w_ih)
    # rows divides exactly -> free metadata reshape, no slice/copy.
    gates_in = gates_flat.reshape(B_pad, T_pad, G)

    # ---- 2) sequential recurrence -------------------------------------------
    # TODO(synk): for small H on v6e, W_hh could be held stationary in the MXU
    # weight registers (matmul_push_rhs/acc_lhs/pop) across the unrolled steps.
    kernel = functools.partial(_recurrence_kernel, t_blk=t_blk, h_pad=H_pad)
    out_bm = pl.pallas_call(
        kernel,
        out_shape=jax.ShapeDtypeStruct((B_pad, T_pad, H_pad), jnp.float32),
        grid_spec=pltpu.PrefetchScalarGridSpec(
            num_scalar_prefetch=0,
            grid=(nb, T_pad // t_blk),
            in_specs=[
                # t-invariant block index -> DMA'd once, stays VMEM-resident.
                pl.BlockSpec((b_blk, 1), lambda b, t: (b, 0)),
                pl.BlockSpec((b_blk, t_blk, G), lambda b, t: (b, t, 0)),
                pl.BlockSpec(memory_space=pl.ANY),            # W_hh stays in HBM
            ],
            out_specs=pl.BlockSpec((b_blk, t_blk, H_pad),
                                   lambda b, t: (b, t, 0)),
            scratch_shapes=[
                pltpu.VMEM((b_blk, H_pad), jnp.float32),      # h carry
                pltpu.VMEM((b_blk, H_pad), jnp.float32),      # c carry
                pltpu.VMEM((H_pad, G), jnp.bfloat16),         # W_hh, single-buffered
                pltpu.SemaphoreType.DMA((1,)),
            ]),
        compiler_params=pltpu.CompilerParams(
            dimension_semantics=("parallel", "arbitrary"),
            vmem_limit_bytes=_VMEM_LIMIT),
    )(lens_pad, gates_in, w_hh)

    # Undo padding; pad_packed_sequence(batch_first=True) -> (B, max_len, H).
    return out_bm[:B, :max_len, :H]


# ---------------------------------------------------------------------------
# Params / reference / test harness
# ---------------------------------------------------------------------------
def init_params(key, driven_size, lstm_input_size, hidden_size):
    """Deterministic synthetic parameters (PyTorch-style uniform fan-in init)."""
    k1, k2, k3, k4 = jax.random.split(key, 4)

    def uniform(k, shape, fan_in):
        bound = fan_in ** -0.5
        return jax.random.uniform(k, shape, jnp.float32, -bound, bound)

    return {
        # LayerNorm(driven_signal_size): default init weight=1, bias=0.
        "ln_w": jnp.ones((1, driven_size), jnp.float32),
        "ln_b": jnp.zeros((1, driven_size), jnp.float32),
        # nn.Linear(D, I): weight (I, D) stored transposed as (D, I).
        "w_fusion": uniform(k1, (driven_size, lstm_input_size), driven_size),
        "b_fusion": uniform(k2, (1, lstm_input_size), driven_size),
        # nn.LSTM weight_ih_l0 (4H, I) -> (I, 4H); weight_hh_l0 (4H, H) -> (H, 4H).
        "w_ih": uniform(k3, (lstm_input_size, 4 * hidden_size), hidden_size),
        "w_hh": uniform(k4, (hidden_size, 4 * hidden_size), hidden_size),
    }


def reference(driven, lengths, params, max_len):
    """Pure-JAX f32 reference matching the PyTorch forward pass."""
    x = driven
    mu = jnp.mean(x, -1, keepdims=True)
    var = jnp.mean((x - mu) ** 2, -1, keepdims=True)
    xn = (x - mu) / jnp.sqrt(var + 1e-5) * params["ln_w"][0] + params["ln_b"][0]
    fused = jnp.maximum(xn @ params["w_fusion"] + params["b_fusion"][0], 0.0)
    B, T, _ = driven.shape
    H = params["w_hh"].shape[0]
    h = jnp.zeros((B, H), jnp.float32)
    c = jnp.zeros((B, H), jnp.float32)
    outs = []
    for t in range(T):
        gates = fused[:, t] @ params["w_ih"] + h @ params["w_hh"]
        i = jax.nn.sigmoid(gates[:, :H])
        f = jax.nn.sigmoid(gates[:, H:2 * H])
        g = jnp.tanh(gates[:, 2 * H:3 * H])
        o = jax.nn.sigmoid(gates[:, 3 * H:])
        c = f * c + i * g
        h = o * jnp.tanh(c)
        outs.append(jnp.where((t < lengths)[:, None], h, 0.0))
    out = jnp.stack(outs, axis=1)
    return out[:, :max_len]


if __name__ == "__main__":
    key = jax.random.PRNGKey(0)
    B, T = 2, 8
    driven_signal_size = 16
    lstm_input_size = 32
    hidden_size = 32

    kp, kd = jax.random.split(key)
    params = init_params(kp, driven_signal_size, lstm_input_size, hidden_size)
    driven = jax.random.normal(kd, (B, T, driven_signal_size), jnp.float32)
    lengths = jnp.array([8, 5], jnp.int32)
    max_len = 8  # host-side static max(lengths); pass explicitly under jit

    out = lstm_stepwise_fusion(driven, lengths, params, max_len=max_len)
    out = jax.block_until_ready(out)

    ref = reference(driven, lengths, params, max_len)
    assert out.shape == ref.shape, (out.shape, ref.shape)
    # Tolerance reflects bf16 MXU operands / bf16 gates_in (f32 accumulation).
    assert jnp.allclose(out, ref, atol=5e-2, rtol=5e-2), (
        "mismatch vs reference; max abs diff = "
        f"{float(jnp.max(jnp.abs(out - ref)))}")
    print("KERNEL_OK")
</pallas_src>

<mosaic_0001>
module attributes {stable_mosaic.version = 11 : i64} {
  func.func @_proj_kernel(%arg0: i32, %arg1: memref<128x16xf32, #tpu.memory_space<vmem>>, %arg2: memref<16x32xbf16, #tpu.memory_space<vmem>>, %arg3: memref<1x32xf32, #tpu.memory_space<vmem>>, %arg4: memref<32x512xbf16, #tpu.memory_space<vmem>>, %arg5: memref<128x512xbf16, #tpu.memory_space<vmem>>) attributes {dimension_semantics = [#tpu.dimension_semantics<parallel>], iteration_bounds = array<i64: 1>, scalar_prefetch = 0 : i64, scratch_operands = 0 : i64, tpu.core_type = #tpu.core_type<tc>, window_params = [{transform_indices = @transform_0, window_bounds = array<i64: 128, 16>}, {pipeline_mode = #tpu.pipeline_mode<synchronous>, transform_indices = @transform_1, window_bounds = array<i64: 16, 32>}, {pipeline_mode = #tpu.pipeline_mode<synchronous>, transform_indices = @transform_2, window_bounds = array<i64: 1, 32>}, {pipeline_mode = #tpu.pipeline_mode<synchronous>, transform_indices = @transform_3, window_bounds = array<i64: 32, 512>}, {transform_indices = @transform_4, window_bounds = array<i64: 128, 512>}]} {
    %c0 = arith.constant 0 : index
    %c0_0 = arith.constant 0 : index
    %0 = vector.load %arg1[%c0, %c0_0] : memref<128x16xf32, #tpu.memory_space<vmem>>, vector<128x16xf32>
    %cst = arith.constant dense<0.000000e+00> : vector<128xf32>
    %1 = vector.multi_reduction <add>, %0, %cst [1] : vector<128x16xf32> to vector<128xf32>
    %2 = vector.shape_cast %1 : vector<128xf32> to vector<128x1xf32>
    %cst_1 = arith.constant 1.600000e+01 : f32
    %3 = vector.broadcast %cst_1 : f32 to vector<128x1xf32>
    %4 = arith.divf %2, %3 : vector<128x1xf32>
    %5 = vector.broadcast %4 : vector<128x1xf32> to vector<128x16xf32>
    %6 = arith.subf %0, %5 : vector<128x16xf32>
    %7 = arith.mulf %6, %6 : vector<128x16xf32>
    %cst_2 = arith.constant dense<0.000000e+00> : vector<128xf32>
    %8 = vector.multi_reduction <add>, %7, %cst_2 [1] : vector<128x16xf32> to vector<128xf32>
    %9 = vector.shape_cast %8 : vector<128xf32> to vector<128x1xf32>
    %cst_3 = arith.constant 1.600000e+01 : f32
    %10 = vector.broadcast %cst_3 : f32 to vector<128x1xf32>
    %11 = arith.divf %9, %10 : vector<128x1xf32>
    %12 = vector.broadcast %4 : vector<128x1xf32> to vector<128x16xf32>
    %13 = arith.subf %0, %12 : vector<128x16xf32>
    %cst_4 = arith.constant 9.99999974E-6 : f32
    %14 = vector.broadcast %cst_4 : f32 to vector<128x1xf32>
    %15 = arith.addf %11, %14 : vector<128x1xf32>
    %16 = math.rsqrt %15 : vector<128x1xf32>
    %17 = vector.broadcast %16 : vector<128x1xf32> to vector<128x16xf32>
    %18 = arith.mulf %13, %17 : vector<128x16xf32>
    %19 = arith.truncf %18 : vector<128x16xf32> to vector<128x16xbf16>
    %c0_5 = arith.constant 0 : index
    %c0_6 = arith.constant 0 : index
    %20 = vector.load %arg2[%c0_5, %c0_6] : memref<16x32xbf16, #tpu.memory_space<vmem>>, vector<16x32xbf16>
    %cst_7 = arith.constant dense<0.000000e+00> : vector<128x32xf32>
    %21 = tpu.matmul %19, %20, %cst_7 {dimension_numbers = #tpu.dot_dimension_numbers<[1], [0], [0], [1], [0, 0, 1, 1], [], []>} : vector<128x16xbf16>, vector<16x32xbf16>, vector<128x32xf32> -> vector<128x32xf32>
    %c0_8 = arith.constant 0 : index
    %c0_9 = arith.constant 0 : index
    %22 = vector.load %arg3[%c0_8, %c0_9] : memref<1x32xf32, #tpu.memory_space<vmem>>, vector<1x32xf32>
    %23 = vector.broadcast %22 : vector<1x32xf32> to vector<128x32xf32>
    %24 = arith.addf %21, %23 : vector<128x32xf32>
    %cst_10 = arith.constant 0.000000e+00 : f32
    %25 = vector.broadcast %cst_10 : f32 to vector<128x32xf32>
    %26 = arith.maximumf %24, %25 : vector<128x32xf32>
    %27 = arith.truncf %26 : vector<128x32xf32> to vector<128x32xbf16>
    %c0_11 = arith.constant 0 : index
    %c0_12 = arith.constant 0 : index
    %28 = vector.load %arg4[%c0_11, %c0_12] : memref<32x512xbf16, #tpu.memory_space<vmem>>, vector<32x512xbf16>
    %cst_13 = arith.constant dense<0.000000e+00> : vector<128x512xf32>
    %29 = tpu.matmul %27, %28, %cst_13 {dimension_numbers = #tpu.dot_dimension_numbers<[1], [0], [0], [1], [0, 0, 1, 1], [], []>} : vector<128x32xbf16>, vector<32x512xbf16>, vector<128x512xf32> -> vector<128x512xf32>
    %30 = arith.truncf %29 : vector<128x512xf32> to vector<128x512xbf16>
    %c0_14 = arith.constant 0 : index
    %c0_15 = arith.constant 0 : index
    %31 = vector.load %arg5[%c0_14, %c0_15] : memref<128x512xbf16, #tpu.memory_space<vmem>>, vector<128x512xbf16>
    tpu.vector_store %arg5[%c0_14, %c0_15], %30 {strides = array<i32>} : memref<128x512xbf16, #tpu.memory_space<vmem>>, vector<128x512xbf16>,
    return
  }
  func.func @transform_0(%arg0: i32) -> (i32, i32) {
    %c0_i32 = arith.constant 0 : i32
    %c0_i32_0 = arith.constant 0 : i32
    return %arg0, %c0_i32 : i32, i32
  }
  func.func @transform_1(%arg0: i32) -> (i32, i32) {
    %c0_i32 = arith.constant 0 : i32
    %c0_i32_0 = arith.constant 0 : i32
    %c0_i32_1 = arith.constant 0 : i32
    return %c0_i32, %c0_i32_0 : i32, i32
  }
  func.func @transform_2(%arg0: i32) -> (i32, i32) {
    %c0_i32 = arith.constant 0 : i32
    %c0_i32_0 = arith.constant 0 : i32
    %c0_i32_1 = arith.constant 0 : i32
    return %c0_i32, %c0_i32_0 : i32, i32
  }
  func.func @transform_3(%arg0: i32) -> (i32, i32) {
    %c0_i32 = arith.constant 0 : i32
    %c0_i32_0 = arith.constant 0 : i32
    %c0_i32_1 = arith.constant 0 : i32
    return %c0_i32, %c0_i32_0 : i32, i32
  }
  func.func @transform_4(%arg0: i32) -> (i32, i32) {
    %c0_i32 = arith.constant 0 : i32
    %c0_i32_0 = arith.constant 0 : i32
    return %arg0, %c0_i32 : i32, i32
  }
}

</mosaic_0001>

<llo_original>
// kernel: tpu_custom_call.1
$region0: #{tpu_custom_call.1}
  #allocation0 [shape = 'u32[]', space=smem, size = 0x4, offset = 0x4, fixed_abs, tag = 'smem constant byte address 0x4 - core index']
  #allocation1 [shape = 'u32[144,128]{1,0:T(1,128)}', space=vmem, size = 0x12000, scoped, tag = 'internal scratch']
  %s0 = inlined_call_operand.vmem [shape: f32[128,16], index: 0, kind: input, shape index: {}]
  %s1 = inlined_call_operand.vmem [shape: bf16[16,32], index: 1, kind: input, shape index: {}]
  %s2 = inlined_call_operand.vmem [shape: f32[1,32], index: 2, kind: input, shape index: {}]
  %s3 = inlined_call_operand.vmem [shape: bf16[32,512], index: 3, kind: input, shape index: {}]
  %s4 = inlined_call_operand.hbm [shape: bf16[128,512], index: 4, kind: output, shape index: {}]
  %s5 = sld [smem:[#allocation0]]
  $region26: #{tpu_custom_call.1} parent=0
    _
  %s7 = ssub.s32 1, %s5
  %s8 = scalar_select 0, %s7, %s5
  $region1: #{tpu_custom_call.1} parent=0
    #allocation2 [shape = 'u8[131072]{0}', space=vmem, size = 0x20000, scoped, tag = 'output window, operand 0, single buffered']
    #allocation3 [shape = 's32[1]{0}', space=sflag, size = 0x4, scoped, tag = 'scoped memory for tpu_custom_call.1']
    %9 = vsyncpa [#allocation3], 0
    // Predicated region
    $region2: #{tpu_custom_call.1} parent=1 // pred_check
      _
    $region3: #{tpu_custom_call.1} parent=1 // pred_check_branch
      %11 = sbr.rel (0) target = $region5
    $region4: #{tpu_custom_call.1} parent=1 // pred_region
      _
    $region5: #{tpu_custom_call.1} parent=1 // pred_fallthru
      _
    // Predicated region
    $region6: #{tpu_custom_call.1} parent=1 // pred_check
      _
    $region7: #{tpu_custom_call.1} parent=1 // pred_check_branch
      %13 = sbr.rel (0) target = $region9
    $region8: #{tpu_custom_call.1} parent=1 // pred_region
      _
    $region9: #{tpu_custom_call.1} parent=1 // pred_fallthru
      _
    // Predicated region
    $region10: #{tpu_custom_call.1} parent=1 // pred_check
      _
    $region11: #{tpu_custom_call.1} parent=1 // pred_check_branch
      %15 = sbr.rel (0) target = $region13
    $region12: #{tpu_custom_call.1} parent=1 // pred_region
      _
    $region13: #{tpu_custom_call.1} parent=1 // pred_fallthru
      _
    // Predicated region
    $region14: #{tpu_custom_call.1} parent=1 // pred_check
      _
    $region15: #{tpu_custom_call.1} parent=1 // pred_check_branch
      %17 = sbr.rel (0) target = $region17
    $region16: #{tpu_custom_call.1} parent=1 // pred_region
      _
    $region17: #{tpu_custom_call.1} parent=1 // pred_fallthru
      _
    %v19 = vld [vmem:[%s0] sm:$0xff]
    %v20 = vld [vmem:[%s0 + $0x8] sm:$0xff]
    %v21 = vld [vmem:[%s0 + $0x10] sm:$0xff]
    %v22 = vld [vmem:[%s0 + $0x18] sm:$0xff]
    %v23 = vld [vmem:[%s0 + $0x20] sm:$0xff]
    %v24 = vld [vmem:[%s0 + $0x28] sm:$0xff]
    %v25 = vld [vmem:[%s0 + $0x30] sm:$0xff]
    %v26 = vld [vmem:[%s0 + $0x38] sm:$0xff]
    %v27 = vld [vmem:[%s0 + $0x40] sm:$0xff]
    %v28 = vld [vmem:[%s0 + $0x48] sm:$0xff]
    %v29 = vld [vmem:[%s0 + $0x50] sm:$0xff]
    %v30 = vld [vmem:[%s0 + $0x58] sm:$0xff]
    %v31 = vld [vmem:[%s0 + $0x60] sm:$0xff]
    %v32 = vld [vmem:[%s0 + $0x68] sm:$0xff]
    %v33 = vld [vmem:[%s0 + $0x70] sm:$0xff]
    %v34 = vld [vmem:[%s0 + $0x78] sm:$0xff]
    %vm35 = vcmask 130048
    %v36 = vsel %vm35, %v19, 0.0
    %37 = vadd.xlane.f32.xlu0 %v36
    %v38 = vpop.xlane.xlu0 %37
    %v39 = vsel %vm35, %v20, 0.0
    %40 = vadd.xlane.f32.xlu0 %v39
    %v41 = vpop.xlane.xlu0 %40
    %v42 = vsel %vm35, %v21, 0.0
    %43 = vadd.xlane.f32.xlu0 %v42
    %v44 = vpop.xlane.xlu0 %43
    %v45 = vsel %vm35, %v22, 0.0
    %46 = vadd.xlane.f32.xlu0 %v45
    %v47 = vpop.xlane.xlu0 %46
    %v48 = vsel %vm35, %v23, 0.0
    %49 = vadd.xlane.f32.xlu0 %v48
    %v50 = vpop.xlane.xlu0 %49
    %v51 = vsel %vm35, %v24, 0.0
    %52 = vadd.xlane.f32.xlu0 %v51
    %v53 = vpop.xlane.xlu0 %52
    %v54 = vsel %vm35, %v25, 0.0
    %55 = vadd.xlane.f32.xlu0 %v54
    %v56 = vpop.xlane.xlu0 %55
    %v57 = vsel %vm35, %v26, 0.0
    %58 = vadd.xlane.f32.xlu0 %v57
    %v59 = vpop.xlane.xlu0 %58
    %v60 = vsel %vm35, %v27, 0.0
    %61 = vadd.xlane.f32.xlu0 %v60
    %v62 = vpop.xlane.xlu0 %61
    %v63 = vsel %vm35, %v28, 0.0
    %64 = vadd.xlane.f32.xlu0 %v63
    %v65 = vpop.xlane.xlu0 %64
    %v66 = vsel %vm35, %v29, 0.0
    %67 = vadd.xlane.f32.xlu0 %v66
    %v68 = vpop.xlane.xlu0 %67
    %v69 = vsel %vm35, %v30, 0.0
    %70 = vadd.xlane.f32.xlu0 %v69
    %v71 = vpop.xlane.xlu0 %70
    %v72 = vsel %vm35, %v31, 0.0
    %73 = vadd.xlane.f32.xlu0 %v72
    %v74 = vpop.xlane.xlu0 %73
    %v75 = vsel %vm35, %v32, 0.0
    %76 = vadd.xlane.f32.xlu0 %v75
    %v77 = vpop.xlane.xlu0 %76
    %v78 = vsel %vm35, %v33, 0.0
    %79 = vadd.xlane.f32.xlu0 %v78
    %v80 = vpop.xlane.xlu0 %79
    %v81 = vsel %vm35, %v34, 0.0
    %82 = vadd.xlane.f32.xlu0 %v81
    %v83 = vpop.xlane.xlu0 %82
    %v84 = vrcp.pop 16.0
    %v85 = vmul.f32 %v38, %v84
    %v86 = vmul.f32 %v41, %v84
    %v87 = vmul.f32 %v44, %v84
    %v88 = vmul.f32 %v47, %v84
    %v89 = vmul.f32 %v50, %v84
    %v90 = vmul.f32 %v53, %v84
    %v91 = vmul.f32 %v56, %v84
    %v92 = vmul.f32 %v59, %v84
    %v93 = vmul.f32 %v62, %v84
    %v94 = vmul.f32 %v65, %v84
    %v95 = vmul.f32 %v68, %v84
    %v96 = vmul.f32 %v71, %v84
    %v97 = vmul.f32 %v74, %v84
    %v98 = vmul.f32 %v77, %v84
    %v99 = vmul.f32 %v80, %v84
    %v100 = vmul.f32 %v83, %v84
    %v101 = vsub.f32 %v19, %v85
    %v102 = vsub.f32 %v20, %v86
    %v103 = vsub.f32 %v21, %v87
    %v104 = vsub.f32 %v22, %v88
    %v105 = vsub.f32 %v23, %v89
    %v106 = vsub.f32 %v24, %v90
    %v107 = vsub.f32 %v25, %v91
    %v108 = vsub.f32 %v26, %v92
    %v109 = vsub.f32 %v27, %v93
    %v110 = vsub.f32 %v28, %v94
    %v111 = vsub.f32 %v29, %v95
    %v112 = vsub.f32 %v30, %v96
    %v113 = vsub.f32 %v31, %v97
    %v114 = vsub.f32 %v32, %v98
    %v115 = vsub.f32 %v33, %v99
    %v116 = vsub.f32 %v34, %v100
    %v117 = vmul.f32 %v101, %v101
    %v118 = vmul.f32 %v102, %v102
    %v119 = vmul.f32 %v103, %v103
    %v120 = vmul.f32 %v104, %v104
    %v121 = vmul.f32 %v105, %v105
    %v122 = vmul.f32 %v106, %v106
    %v123 = vmul.f32 %v107, %v107
    %v124 = vmul.f32 %v108, %v108
    %v125 = vmul.f32 %v109, %v109
    %v126 = vmul.f32 %v110, %v110
    %v127 = vmul.f32 %v111, %v111
    %v128 = vmul.f32 %v112, %v112
    %v129 = vmul.f32 %v113, %v113
    %v130 = vmul.f32 %v114, %v114
    %v131 = vmul.f32 %v115, %v115
    %v132 = vmul.f32 %v116, %v116
    %v133 = vsel %vm35, %v117, 0.0
    %134 = vadd.xlane.f32.xlu0 %v133
    %v135 = vpop.xlane.xlu0 %134
    %v136 = vsel %vm35, %v118, 0.0
    %137 = vadd.xlane.f32.xlu0 %v136
    %v138 = vpop.xlane.xlu0 %137
    %v139 = vsel %vm35, %v119, 0.0
    %140 = vadd.xlane.f32.xlu0 %v139
    %v141 = vpop.xlane.xlu0 %140
    %v142 = vsel %vm35, %v120, 0.0
    %143 = vadd.xlane.f32.xlu0 %v142
    %v144 = vpop.xlane.xlu0 %143
    %v145 = vsel %vm35, %v121, 0.0
    %146 = vadd.xlane.f32.xlu0 %v145
    %v147 = vpop.xlane.xlu0 %146
    %v148 = vsel %vm35, %v122, 0.0
    %149 = vadd.xlane.f32.xlu0 %v148
    %v150 = vpop.xlane.xlu0 %149
    %v151 = vsel %vm35, %v123, 0.0
    %152 = vadd.xlane.f32.xlu0 %v151
    %v153 = vpop.xlane.xlu0 %152
    %v154 = vsel %vm35, %v124, 0.0
    %155 = vadd.xlane.f32.xlu0 %v154
    %v156 = vpop.xlane.xlu0 %155
    %v157 = vsel %vm35, %v125, 0.0
    %158 = vadd.xlane.f32.xlu0 %v157
    %v159 = vpop.xlane.xlu0 %158
    %v160 = vsel %vm35, %v126, 0.0
    %161 = vadd.xlane.f32.xlu0 %v160
    %v162 = vpop.xlane.xlu0 %161
    %v163 = vsel %vm35, %v127, 0.0
    %164 = vadd.xlane.f32.xlu0 %v163
    %v165 = vpop.xlane.xlu0 %164
    %v166 = vsel %vm35, %v128, 0.0
    %167 = vadd.xlane.f32.xlu0 %v166
    %v168 = vpop.xlane.xlu0 %167
    %v169 = vsel %vm35, %v129, 0.0
    %170 = vadd.xlane.f32.xlu0 %v169
    %v171 = vpop.xlane.xlu0 %170
    %v172 = vsel %vm35, %v130, 0.0
    %173 = vadd.xlane.f32.xlu0 %v172
    %v174 = vpop.xlane.xlu0 %173
    %v175 = vsel %vm35, %v131, 0.0
    %176 = vadd.xlane.f32.xlu0 %v175
    %v177 = vpop.xlane.xlu0 %176
    %v178 = vsel %vm35, %v132, 0.0
    %179 = vadd.xlane.f32.xlu0 %v178
    %v180 = vpop.xlane.xlu0 %179
    %v181 = vmul.f32 %v135, %v84
    %v182 = vmul.f32 %v138, %v84
    %v183 = vmul.f32 %v141, %v84
    %v184 = vmul.f32 %v144, %v84
    %v185 = vmul.f32 %v147, %v84
    %v186 = vmul.f32 %v150, %v84
    %v187 = vmul.f32 %v153, %v84
    %v188 = vmul.f32 %v156, %v84
    %v189 = vmul.f32 %v159, %v84
    %v190 = vmul.f32 %v162, %v84
    %v191 = vmul.f32 %v165, %v84
    %v192 = vmul.f32 %v168, %v84
    %v193 = vmul.f32 %v171, %v84
    %v194 = vmul.f32 %v174, %v84
    %v195 = vmul.f32 %v177, %v84
    %v196 = vmul.f32 %v180, %v84
    %v197 = vadd.f32 %v181, 1e-05
    %v198 = vadd.f32 %v182, 1e-05
    %v199 = vadd.f32 %v183, 1e-05
    %v200 = vadd.f32 %v184, 1e-05
    %v201 = vadd.f32 %v185, 1e-05
    %v202 = vadd.f32 %v186, 1e-05
    %v203 = vadd.f32 %v187, 1e-05
    %v204 = vadd.f32 %v188, 1e-05
    %v205 = vadd.f32 %v189, 1e-05
    %v206 = vadd.f32 %v190, 1e-05
    %v207 = vadd.f32 %v191, 1e-05
    %v208 = vadd.f32 %v192, 1e-05
    %v209 = vadd.f32 %v193, 1e-05
    %v210 = vadd.f32 %v194, 1e-05
    %v211 = vadd.f32 %v195, 1e-05
    %v212 = vadd.f32 %v196, 1e-05
    %v213 = vrsqrt.pop %v197
    %v214 = vrsqrt.pop %v198
    %v215 = vrsqrt.pop %v199
    %v216 = vrsqrt.pop %v200
    %v217 = vrsqrt.pop %v201
    %v218 = vrsqrt.pop %v202
    %v219 = vrsqrt.pop %v203
    %v220 = vrsqrt.pop %v204
    %v221 = vrsqrt.pop %v205
    %v222 = vrsqrt.pop %v206
    %v223 = vrsqrt.pop %v207
    %v224 = vrsqrt.pop %v208
    %v225 = vrsqrt.pop %v209
    %v226 = vrsqrt.pop %v210
    %v227 = vrsqrt.pop %v211
    %v228 = vrsqrt.pop %v212
    %v229 = vmul.f32 %v101, %v213
    %v230 = vmul.f32 %v102, %v214
    %v231 = vmul.f32 %v103, %v215
    %v232 = vmul.f32 %v104, %v216
    %v233 = vmul.f32 %v105, %v217
    %v234 = vmul.f32 %v106, %v218
    %v235 = vmul.f32 %v107, %v219
    %v236 = vmul.f32 %v108, %v220
    %v237 = vmul.f32 %v109, %v221
    %v238 = vmul.f32 %v110, %v222
    %v239 = vmul.f32 %v111, %v223
    %v240 = vmul.f32 %v112, %v224
    %v241 = vmul.f32 %v113, %v225
    %v242 = vmul.f32 %v114, %v226
    %v243 = vmul.f32 %v115, %v227
    %v244 = vmul.f32 %v116, %v228
    %v245 = vpack.c.bf16 %v230, %v229
    %v246 = vpack.c.bf16 %v232, %v231
    %v247 = vpack.c.bf16 %v234, %v233
    %v248 = vpack.c.bf16 %v236, %v235
    %v249 = vpack.c.bf16 %v238, %v237
    %v250 = vpack.c.bf16 %v240, %v239
    %v251 = vpack.c.bf16 %v242, %v241
    %v252 = vpack.c.bf16 %v244, %v243
    %v253 = vld [vmem:[%s1] sm:$0xf]
    %v254 = vld [vmem:[%s1 + $0x4] sm:$0xf]
    %v255 = vld [vmem:[%s2] sm:$0x1]
    %v257 = vlaneseq
    %v258 = vshrl.u32 %v257, 7
    %v259 = vsub.s32 0, %v258
    %v260 = vrot.slane %v255, %v259
    %v264 = vunpack.c.l.b16 %v253
    %v265 = vunpack.c.l.b16 %v254
    %v266 = vpack.c.b16 %v265, %v264
    %v269 = vsel %vm35, %v245, 0
    %v272 = vsel %vm35, %v246, 0
    %v275 = vsel %vm35, %v247, 0
    %v278 = vsel %vm35, %v248, 0
    %v281 = vsel %vm35, %v249, 0
    %v284 = vsel %vm35, %v250, 0
    %v287 = vsel %vm35, %v251, 0
    %v290 = vsel %vm35, %v252, 0
    %292 = vmatprep.subr.bf16.mxu0 0
    %293 = vmatpush1.bf16.msra.mxu0 %v266
    %294 = vmatprep.subr.bf16.mxu0 0
    %295 = vmatpush1.bf16.msra.mxu0 0
    %296 = vmatprep.subr.bf16.mxu0 0
    %297 = vmatpush1.bf16.msra.mxu0 0
    %298 = vmatprep.subr.bf16.mxu0 0
    %299 = vmatpush1.bf16.msra.mxu0 0
    %300 = vmatprep.subr.bf16.mxu0 0
    %301 = vmatpush1.bf16.msra.mxu0 0
    %302 = vmatprep.subr.bf16.mxu0 0
    %303 = vmatpush1.bf16.msra.mxu0 0
    %304 = vmatprep.subr.bf16.mxu0 0
    %305 = vmatpush1.bf16.msra.mxu0 0
    %306 = vmatprep.subr.bf16.mxu0 0
    %307 = vmatpush1.bf16.msra.mxu0 0
    %308 = vmatprep.subr.bf16.mxu0 0
    %309 = vmatpush1.bf16.msra.mxu0 0
    %310 = vmatprep.subr.bf16.mxu0 0
    %311 = vmatpush1.bf16.msra.mxu0 0
    %312 = vmatprep.subr.bf16.mxu0 0
    %313 = vmatpush1.bf16.msra.mxu0 0
    %314 = vmatprep.subr.bf16.mxu0 0
    %315 = vmatpush1.bf16.msra.mxu0 0
    %316 = vmatprep.subr.bf16.mxu0 0
    %317 = vmatpush1.bf16.msra.mxu0 0
    %318 = vmatprep.subr.bf16.mxu0 0
    %319 = vmatpush1.bf16.msra.mxu0 0
    %320 = vmatprep.subr.bf16.mxu0 0
    %321 = vmatpush1.bf16.msra.mxu0 0
    %322 = vmatprep.subr.bf16.mxu0 0
    %323 = vmatpush1.bf16.msra.mxu0 0
    %324 = vmatprep.mubr.bf16.mxu0 0
    %325 = vmatmul.mubr.bf16.gmra.mrb[0].mxu0 %v269
    %v326 = vpop.f32.mrb[0].mxu0
    %v327 = vadd.f32 %v260, %v326
    %v328 = vpop.f32.mrb[0].mxu0
    %v329 = vpop.f32.mrb[0].mxu0
    %v330 = vadd.f32 %v260, %v329
    %v331 = vpop.f32.mrb[0].mxu0
    %332 = vmatprep.mubr.bf16.mxu0 0
    %333 = vmatmul.mubr.bf16.gmra.mrb[0].mxu0 %v272
    %v334 = vpop.f32.mrb[0].mxu0
    %v335 = vadd.f32 %v260, %v334
    %v336 = vpop.f32.mrb[0].mxu0
    %v337 = vpop.f32.mrb[0].mxu0
    %v338 = vadd.f32 %v260, %v337
    %v339 = vpop.f32.mrb[0].mxu0
    %340 = vmatprep.mubr.bf16.mxu0 0
    %341 = vmatmul.mubr.bf16.gmra.mrb[0].mxu0 %v275
    %v342 = vpop.f32.mrb[0].mxu0
    %v343 = vadd.f32 %v260, %v342
    %v344 = vpop.f32.mrb[0].mxu0
    %v345 = vpop.f32.mrb[0].mxu0
    %v346 = vadd.f32 %v260, %v345
    %v347 = vpop.f32.mrb[0].mxu0
    %348 = vmatprep.mubr.bf16.mxu0 0
    %349 = vmatmul.mubr.bf16.gmra.mrb[0].mxu0 %v278
    %v350 = vpop.f32.mrb[0].mxu0
    %v351 = vadd.f32 %v260, %v350
    %v352 = vpop.f32.mrb[0].mxu0
    %v353 = vpop.f32.mrb[0].mxu0
    %v354 = vadd.f32 %v260, %v353
    %v355 = vpop.f32.mrb[0].mxu0
    %356 = vmatprep.mubr.bf16.mxu0 0
    %357 = vmatmul.mubr.bf16.gmra.mrb[0].mxu0 %v281
    %v358 = vpop.f32.mrb[0].mxu0
    %v359 = vadd.f32 %v260, %v358
    %v360 = vpop.f32.mrb[0].mxu0
    %v361 = vpop.f32.mrb[0].mxu0
    %v362 = vadd.f32 %v260, %v361
    %v363 = vpop.f32.mrb[0].mxu0
    %364 = vmatprep.mubr.bf16.mxu0 0
    %365 = vmatmul.mubr.bf16.gmra.mrb[0].mxu0 %v284
    %v366 = vpop.f32.mrb[0].mxu0
    %v367 = vadd.f32 %v260, %v366
    %v368 = vpop.f32.mrb[0].mxu0
    %v369 = vpop.f32.mrb[0].mxu0
    %v370 = vadd.f32 %v260, %v369
    %v371 = vpop.f32.mrb[0].mxu0
    %372 = vmatprep.mubr.bf16.mxu0 0
    %373 = vmatmul.mubr.bf16.gmra.mrb[0].mxu0 %v287
    %v374 = vpop.f32.mrb[0].mxu0
    %v375 = vadd.f32 %v260, %v374
    %v376 = vpop.f32.mrb[0].mxu0
    %v377 = vpop.f32.mrb[0].mxu0
    %v378 = vadd.f32 %v260, %v377
    %v379 = vpop.f32.mrb[0].mxu0
    %380 = vmatprep.mubr.bf16.mxu0 0
    %381 = vmatmul.mubr.bf16.gmra.mrb[0].mxu0 %v290
    %v382 = vpop.f32.mrb[0].mxu0
    %v383 = vadd.f32 %v260, %v382
    %v384 = vpop.f32.mrb[0].mxu0
    %v385 = vpop.f32.mrb[0].mxu0
    %v386 = vadd.f32 %v260, %v385
    %v387 = vpop.f32.mrb[0].mxu0
    %388 = vdwg.mxu0
    %v389 = vmax.f32 %v327, 0.0
    %v390 = vmax.f32 %v330, 0.0
    %v391 = vmax.f32 %v335, 0.0
    %v392 = vmax.f32 %v338, 0.0
    %v393 = vmax.f32 %v343, 0.0
    %v394 = vmax.f32 %v346, 0.0
    %v395 = vmax.f32 %v351, 0.0
    %v396 = vmax.f32 %v354, 0.0
    %v397 = vmax.f32 %v359, 0.0
    %v398 = vmax.f32 %v362, 0.0
    %v399 = vmax.f32 %v367, 0.0
    %v400 = vmax.f32 %v370, 0.0
    %v401 = vmax.f32 %v375, 0.0
    %v402 = vmax.f32 %v378, 0.0
    %v403 = vmax.f32 %v383, 0.0
    %v404 = vmax.f32 %v386, 0.0
    %v405 = vpack.c.bf16 %v390, %v389
    %v406 = vpack.c.bf16 %v392, %v391
    %v407 = vpack.c.bf16 %v394, %v393
    %v408 = vpack.c.bf16 %v396, %v395
    %v409 = vpack.c.bf16 %v398, %v397
    %v410 = vpack.c.bf16 %v400, %v399
    %v411 = vpack.c.bf16 %v402, %v401
    %v412 = vpack.c.bf16 %v404, %v403
    %v413 = vld [vmem:[%s3] sm:$0xff]
    %v414 = vld [vmem:[%s3 + $0x8] sm:$0xff]
    %v415 = vld [vmem:[%s3 + $0x10] sm:$0xff]
    %v416 = vld [vmem:[%s3 + $0x18] sm:$0xff]
    %v417 = vld [vmem:[%s3 + $0x20] sm:$0xff]
    %v418 = vld [vmem:[%s3 + $0x28] sm:$0xff]
    %v419 = vld [vmem:[%s3 + $0x30] sm:$0xff]
    %v420 = vld [vmem:[%s3 + $0x38] sm:$0xff]
    %v429 = vunpack.c.l.b16 %v413
    %v430 = vunpack.c.h.b16 %v413
    %v431 = vunpack.c.l.b16 %v414
    %v432 = vunpack.c.h.b16 %v414
    %v433 = vunpack.c.l.b16 %v415
    %v434 = vunpack.c.h.b16 %v415
    %v435 = vunpack.c.l.b16 %v416
    %v436 = vunpack.c.h.b16 %v416
    %v437 = vunpack.c.l.b16 %v417
    %v438 = vunpack.c.h.b16 %v417
    %v439 = vunpack.c.l.b16 %v418
    %v440 = vunpack.c.h.b16 %v418
    %v441 = vunpack.c.l.b16 %v419
    %v442 = vunpack.c.h.b16 %v419
    %v443 = vunpack.c.l.b16 %v420
    %v444 = vunpack.c.h.b16 %v420
    %v445 = vpack.c.b16 %v433, %v429
    %v446 = vpack.c.b16 %v434, %v430
    %v447 = vpack.c.b16 %v435, %v431
    %v448 = vpack.c.b16 %v436, %v432
    %v449 = vpack.c.b16 %v441, %v437
    %v450 = vpack.c.b16 %v442, %v438
    %v451 = vpack.c.b16 %v443, %v439
    %v452 = vpack.c.b16 %v444, %v440
    %vm461 = vcmask 261120
    %v463 = vsel %vm461, %v405, 0
    %v466 = vsel %vm461, %v406, 0
    %v469 = vsel %vm461, %v407, 0
    %v472 = vsel %vm461, %v408, 0
    %v475 = vsel %vm461, %v409, 0
    %v478 = vsel %vm461, %v410, 0
    %v481 = vsel %vm461, %v411, 0
    %v484 = vsel %vm461, %v412, 0
    %486 = vmatprep.subr.bf16.mxu0 %v446
    %487 = vmatpush1.bf16.msra.mxu0 %v445
    %488 = vmatprep.subr.bf16.mxu0 %v450
    %489 = vmatpush1.bf16.msra.mxu0 %v449
    %490 = vmatprep.subr.bf16.mxu0 0
    %491 = vmatpush1.bf16.msra.mxu0 0
    %492 = vmatprep.subr.bf16.mxu0 0
    %493 = vmatpush1.bf16.msra.mxu0 0
    %494 = vmatprep.subr.bf16.mxu0 0
    %495 = vmatpush1.bf16.msra.mxu0 0
    %496 = vmatprep.subr.bf16.mxu0 0
    %497 = vmatpush1.bf16.msra.mxu0 0
    %498 = vmatprep.subr.bf16.mxu0 0
    %499 = vmatpush1.bf16.msra.mxu0 0
    %500 = vmatprep.subr.bf16.mxu0 0
    %501 = vmatpush1.bf16.msra.mxu0 0
    %502 = vmatprep.subr.bf16.mxu0 0
    %503 = vmatpush1.bf16.msra.mxu0 0
    %504 = vmatprep.subr.bf16.mxu0 0
    %505 = vmatpush1.bf16.msra.mxu0 0
    %506 = vmatprep.subr.bf16.mxu0 0
    %507 = vmatpush1.bf16.msra.mxu0 0
    %508 = vmatprep.subr.bf16.mxu0 0
    %509 = vmatpush1.bf16.msra.mxu0 0
    %510 = vmatprep.subr.bf16.mxu0 0
    %511 = vmatpush1.bf16.msra.mxu0 0
    %512 = vmatprep.subr.bf16.mxu0 0
    %513 = vmatpush1.bf16.msra.mxu0 0
    %514 = vmatprep.subr.bf16.mxu0 0
    %515 = vmatpush1.bf16.msra.mxu0 0
    %516 = vmatprep.subr.bf16.mxu0 0
    %517 = vmatpush1.bf16.msra.mxu0 0
    %518 = vmatprep.mubr.bf16.mxu0 0
    %519 = vmatmul.mubr.bf16.gmra.mrb[0].mxu0 %v463
    %v520 = vpop.f32.mrb[0].mxu0
    %v521 = vadd.f32 0.0, %v520
    %v522 = vpop.f32.mrb[0].mxu0
    %v523 = vadd.f32 0.0, %v522
    %v524 = vpop.f32.mrb[0].mxu0
    %v525 = vadd.f32 0.0, %v524
    %v526 = vpop.f32.mrb[0].mxu0
    %v527 = vadd.f32 0.0, %v526
    %528 = vmatprep.mubr.bf16.mxu0 0
    %529 = vmatmul.mubr.bf16.gmra.mrb[0].mxu0 %v466
    %v530 = vpop.f32.mrb[0].mxu0
    %v531 = vadd.f32 0.0, %v530
    %v532 = vpop.f32.mrb[0].mxu0
    %v533 = vadd.f32 0.0, %v532
    %v534 = vpop.f32.mrb[0].mxu0
    %v535 = vadd.f32 0.0, %v534
    %v536 = vpop.f32.mrb[0].mxu0
    %v537 = vadd.f32 0.0, %v536
    %538 = vmatprep.mubr.bf16.mxu0 0
    %539 = vmatmul.mubr.bf16.gmra.mrb[0].mxu0 %v469
    %v540 = vpop.f32.mrb[0].mxu0
    %v541 = vadd.f32 0.0, %v540
    %v542 = vpop.f32.mrb[0].mxu0
    %v543 = vadd.f32 0.0, %v542
    %v544 = vpop.f32.mrb[0].mxu0
    %v545 = vadd.f32 0.0, %v544
    %v546 = vpop.f32.mrb[0].mxu0
    %v547 = vadd.f32 0.0, %v546
    %548 = vmatprep.mubr.bf16.mxu0 0
    %549 = vmatmul.mubr.bf16.gmra.mrb[0].mxu0 %v472
    %v550 = vpop.f32.mrb[0].mxu0
    %v551 = vadd.f32 0.0, %v550
    %v552 = vpop.f32.mrb[0].mxu0
    %v553 = vadd.f32 0.0, %v552
    %v554 = vpop.f32.mrb[0].mxu0
    %v555 = vadd.f32 0.0, %v554
    %v556 = vpop.f32.mrb[0].mxu0
    %v557 = vadd.f32 0.0, %v556
    %558 = vmatprep.mubr.bf16.mxu0 0
    %559 = vmatmul.mubr.bf16.gmra.mrb[0].mxu0 %v475
    %v560 = vpop.f32.mrb[0].mxu0
    %v561 = vadd.f32 0.0, %v560
    %v562 = vpop.f32.mrb[0].mxu0
    %v563 = vadd.f32 0.0, %v562
    %v564 = vpop.f32.mrb[0].mxu0
    %v565 = vadd.f32 0.0, %v564
    %v566 = vpop.f32.mrb[0].mxu0
    %v567 = vadd.f32 0.0, %v566
    %568 = vmatprep.mubr.bf16.mxu0 0
    %569 = vmatmul.mubr.bf16.gmra.mrb[0].mxu0 %v478
    %v570 = vpop.f32.mrb[0].mxu0
    %v571 = vadd.f32 0.0, %v570
    %v572 = vpop.f32.mrb[0].mxu0
    %v573 = vadd.f32 0.0, %v572
    %v574 = vpop.f32.mrb[0].mxu0
    %v575 = vadd.f32 0.0, %v574
    %v576 = vpop.f32.mrb[0].mxu0
    %v577 = vadd.f32 0.0, %v576
    %578 = vmatprep.mubr.bf16.mxu0 0
    %579 = vmatmul.mubr.bf16.gmra.mrb[0].mxu0 %v481
    %v580 = vpop.f32.mrb[0].mxu0
    %v581 = vadd.f32 0.0, %v580
    %v582 = vpop.f32.mrb[0].mxu0
    %v583 = vadd.f32 0.0, %v582
    %v584 = vpop.f32.mrb[0].mxu0
    %v585 = vadd.f32 0.0, %v584
    %v586 = vpop.f32.mrb[0].mxu0
    %v587 = vadd.f32 0.0, %v586
    %588 = vmatprep.mubr.bf16.mxu0 0
    %589 = vmatmul.mubr.bf16.gmra.mrb[0].mxu0 %v484
    %v590 = vpop.f32.mrb[0].mxu0
    %v591 = vadd.f32 0.0, %v590
    %v592 = vpop.f32.mrb[0].mxu0
    %v593 = vadd.f32 0.0, %v592
    %v594 = vpop.f32.mrb[0].mxu0
    %v595 = vadd.f32 0.0, %v594
    %v596 = vpop.f32.mrb[0].mxu0
    %v597 = vadd.f32 0.0, %v596
    %598 = vdwg.mxu0
    %599 = vmatprep.subr.bf16.mxu0 %v448
    %600 = vmatpush1.bf16.msra.mxu0 %v447
    %601 = vmatprep.subr.bf16.mxu0 %v452
    %602 = vmatpush1.bf16.msra.mxu0 %v451
    %603 = vmatprep.subr.bf16.mxu0 0
    %604 = vmatpush1.bf16.msra.mxu0 0
    %605 = vmatprep.subr.bf16.mxu0 0
    %606 = vmatpush1.bf16.msra.mxu0 0
    %607 = vmatprep.subr.bf16.mxu0 0
    %608 = vmatpush1.bf16.msra.mxu0 0
    %609 = vmatprep.subr.bf16.mxu0 0
    %610 = vmatpush1.bf16.msra.mxu0 0
    %611 = vmatprep.subr.bf16.mxu0 0
    %612 = vmatpush1.bf16.msra.mxu0 0
    %613 = vmatprep.subr.bf16.mxu0 0
    %614 = vmatpush1.bf16.msra.mxu0 0
    %615 = vmatprep.subr.bf16.mxu0 0
    %616 = vmatpush1.bf16.msra.mxu0 0
    %617 = vmatprep.subr.bf16.mxu0 0
    %618 = vmatpush1.bf16.msra.mxu0 0
    %619 = vmatprep.subr.bf16.mxu0 0
    %620 = vmatpush1.bf16.msra.mxu0 0
    %621 = vmatprep.subr.bf16.mxu0 0
    %622 = vmatpush1.bf16.msra.mxu0 0
    %623 = vmatprep.subr.bf16.mxu0 0
    %624 = vmatpush1.bf16.msra.mxu0 0
    %625 = vmatprep.subr.bf16.mxu0 0
    %626 = vmatpush1.bf16.msra.mxu0 0
    %627 = vmatprep.subr.bf16.mxu0 0
    %628 = vmatpush1.bf16.msra.mxu0 0
    %629 = vmatprep.subr.bf16.mxu0 0
    %630 = vmatpush1.bf16.msra.mxu0 0
    %631 = vmatprep.mubr.bf16.mxu0 0
    %632 = vmatmul.mubr.bf16.gmra.mrb[0].mxu0 %v463
    %v633 = vpop.f32.mrb[0].mxu0
    %v634 = vadd.f32 0.0, %v633
    %v635 = vpop.f32.mrb[0].mxu0
    %v636 = vadd.f32 0.0, %v635
    %v637 = vpop.f32.mrb[0].mxu0
    %v638 = vadd.f32 0.0, %v637
    %v639 = vpop.f32.mrb[0].mxu0
    %v640 = vadd.f32 0.0, %v639
    %641 = vmatprep.mubr.bf16.mxu0 0
    %642 = vmatmul.mubr.bf16.gmra.mrb[0].mxu0 %v466
    %v643 = vpop.f32.mrb[0].mxu0
    %v644 = vadd.f32 0.0, %v643
    %v645 = vpop.f32.mrb[0].mxu0
    %v646 = vadd.f32 0.0, %v645
    %v647 = vpop.f32.mrb[0].mxu0
    %v648 = vadd.f32 0.0, %v647
    %v649 = vpop.f32.mrb[0].mxu0
    %v650 = vadd.f32 0.0, %v649
    %651 = vmatprep.mubr.bf16.mxu0 0
    %652 = vmatmul.mubr.bf16.gmra.mrb[0].mxu0 %v469
    %v653 = vpop.f32.mrb[0].mxu0
    %v654 = vadd.f32 0.0, %v653
    %v655 = vpop.f32.mrb[0].mxu0
    %v656 = vadd.f32 0.0, %v655
    %v657 = vpop.f32.mrb[0].mxu0
    %v658 = vadd.f32 0.0, %v657
    %v659 = vpop.f32.mrb[0].mxu0
    %v660 = vadd.f32 0.0, %v659
    %661 = vmatprep.mubr.bf16.mxu0 0
    %662 = vmatmul.mubr.bf16.gmra.mrb[0].mxu0 %v472
    %v663 = vpop.f32.mrb[0].mxu0
    %v664 = vadd.f32 0.0, %v663
    %v665 = vpop.f32.mrb[0].mxu0
    %v666 = vadd.f32 0.0, %v665
    %v667 = vpop.f32.mrb[0].mxu0
    %v668 = vadd.f32 0.0, %v667
    %v669 = vpop.f32.mrb[0].mxu0
    %v670 = vadd.f32 0.0, %v669
    %671 = vmatprep.mubr.bf16.mxu0 0
    %672 = vmatmul.mubr.bf16.gmra.mrb[0].mxu0 %v475
    %v673 = vpop.f32.mrb[0].mxu0
    %v674 = vadd.f32 0.0, %v673
    %v675 = vpop.f32.mrb[0].mxu0
    %v676 = vadd.f32 0.0, %v675
    %v677 = vpop.f32.mrb[0].mxu0
    %v678 = vadd.f32 0.0, %v677
    %v679 = vpop.f32.mrb[0].mxu0
    %v680 = vadd.f32 0.0, %v679
    %681 = vmatprep.mubr.bf16.mxu0 0
    %682 = vmatmul.mubr.bf16.gmra.mrb[0].mxu0 %v478
    %v683 = vpop.f32.mrb[0].mxu0
    %v684 = vadd.f32 0.0, %v683
    %v685 = vpop.f32.mrb[0].mxu0
    %v686 = vadd.f32 0.0, %v685
    %v687 = vpop.f32.mrb[0].mxu0
    %v688 = vadd.f32 0.0, %v687
    %v689 = vpop.f32.mrb[0].mxu0
    %v690 = vadd.f32 0.0, %v689
    %691 = vmatprep.mubr.bf16.mxu0 0
    %692 = vmatmul.mubr.bf16.gmra.mrb[0].mxu0 %v481
    %v693 = vpop.f32.mrb[0].mxu0
    %v694 = vadd.f32 0.0, %v693
    %v695 = vpop.f32.mrb[0].mxu0
    %v696 = vadd.f32 0.0, %v695
    %v697 = vpop.f32.mrb[0].mxu0
    %v698 = vadd.f32 0.0, %v697
    %v699 = vpop.f32.mrb[0].mxu0
    %v700 = vadd.f32 0.0, %v699
    %701 = vmatprep.mubr.bf16.mxu0 0
    %702 = vmatmul.mubr.bf16.gmra.mrb[0].mxu0 %v484
    %v703 = vpop.f32.mrb[0].mxu0
    %v704 = vadd.f32 0.0, %v703
    %v705 = vpop.f32.mrb[0].mxu0
    %v706 = vadd.f32 0.0, %v705
    %v707 = vpop.f32.mrb[0].mxu0
    %v708 = vadd.f32 0.0, %v707
    %v709 = vpop.f32.mrb[0].mxu0
    %v710 = vadd.f32 0.0, %v709
    %711 = vdwg.mxu0
    %v712 = vpack.c.bf16 %v525, %v521
    %v713 = vpack.c.bf16 %v527, %v523
    %v714 = vpack.c.bf16 %v638, %v634
    %v715 = vpack.c.bf16 %v640, %v636
    %v716 = vpack.c.bf16 %v535, %v531
    %v717 = vpack.c.bf16 %v537, %v533
    %v718 = vpack.c.bf16 %v648, %v644
    %v719 = vpack.c.bf16 %v650, %v646
    %v720 = vpack.c.bf16 %v545, %v541
    %v721 = vpack.c.bf16 %v547, %v543
    %v722 = vpack.c.bf16 %v658, %v654
    %v723 = vpack.c.bf16 %v660, %v656
    %v724 = vpack.c.bf16 %v555, %v551
    %v725 = vpack.c.bf16 %v557, %v553
    %v726 = vpack.c.bf16 %v668, %v664
    %v727 = vpack.c.bf16 %v670, %v666
    %v728 = vpack.c.bf16 %v565, %v561
    %v729 = vpack.c.bf16 %v567, %v563
    %v730 = vpack.c.bf16 %v678, %v674
    %v731 = vpack.c.bf16 %v680, %v676
    %v732 = vpack.c.bf16 %v575, %v571
    %v733 = vpack.c.bf16 %v577, %v573
    %v734 = vpack.c.bf16 %v688, %v684
    %v735 = vpack.c.bf16 %v690, %v686
    %v736 = vpack.c.bf16 %v585, %v581
    %v737 = vpack.c.bf16 %v587, %v583
    %v738 = vpack.c.bf16 %v698, %v694
    %v739 = vpack.c.bf16 %v700, %v696
    %v740 = vpack.c.bf16 %v595, %v591
    %v741 = vpack.c.bf16 %v597, %v593
    %v742 = vpack.c.bf16 %v708, %v704
    %v743 = vpack.c.bf16 %v710, %v706
    %v776 = vunpack.c.l.b16 %v712
    %v777 = vunpack.c.l.b16 %v713
    %v778 = vunpack.c.l.b16 %v714
    %v779 = vunpack.c.l.b16 %v715
    %v780 = vunpack.c.h.b16 %v712
    %v781 = vunpack.c.h.b16 %v713
    %v782 = vunpack.c.h.b16 %v714
    %v783 = vunpack.c.h.b16 %v715
    %v784 = vunpack.c.l.b16 %v716
    %v785 = vunpack.c.l.b16 %v717
    %v786 = vunpack.c.l.b16 %v718
    %v787 = vunpack.c.l.b16 %v719
    %v788 = vunpack.c.h.b16 %v716
    %v789 = vunpack.c.h.b16 %v717
    %v790 = vunpack.c.h.b16 %v718
    %v791 = vunpack.c.h.b16 %v719
    %v792 = vunpack.c.l.b16 %v720
    %v793 = vunpack.c.l.b16 %v721
    %v794 = vunpack.c.l.b16 %v722
    %v795 = vunpack.c.l.b16 %v723
    %v796 = vunpack.c.h.b16 %v720
    %v797 = vunpack.c.h.b16 %v721
    %v798 = vunpack.c.h.b16 %v722
    %v799 = vunpack.c.h.b16 %v723
    %v800 = vunpack.c.l.b16 %v724
    %v801 = vunpack.c.l.b16 %v725
    %v802 = vunpack.c.l.b16 %v726
    %v803 = vunpack.c.l.b16 %v727
    %v804 = vunpack.c.h.b16 %v724
    %v805 = vunpack.c.h.b16 %v725
    %v806 = vunpack.c.h.b16 %v726
    %v807 = vunpack.c.h.b16 %v727
    %v808 = vunpack.c.l.b16 %v728
    %v809 = vunpack.c.l.b16 %v729
    %v810 = vunpack.c.l.b16 %v730
    %v811 = vunpack.c.l.b16 %v731
    %v812 = vunpack.c.h.b16 %v728
    %v813 = vunpack.c.h.b16 %v729
    %v814 = vunpack.c.h.b16 %v730
    %v815 = vunpack.c.h.b16 %v731
    %v816 = vunpack.c.l.b16 %v732
    %v817 = vunpack.c.l.b16 %v733
    %v818 = vunpack.c.l.b16 %v734
    %v819 = vunpack.c.l.b16 %v735
    %v820 = vunpack.c.h.b16 %v732
    %v821 = vunpack.c.h.b16 %v733
    %v822 = vunpack.c.h.b16 %v734
    %v823 = vunpack.c.h.b16 %v735
    %v824 = vunpack.c.l.b16 %v736
    %v825 = vunpack.c.l.b16 %v737
    %v826 = vunpack.c.l.b16 %v738
    %v827 = vunpack.c.l.b16 %v739
    %v828 = vunpack.c.h.b16 %v736
    %v829 = vunpack.c.h.b16 %v737
    %v830 = vunpack.c.h.b16 %v738
    %v831 = vunpack.c.h.b16 %v739
    %v832 = vunpack.c.l.b16 %v740
    %v833 = vunpack.c.l.b16 %v741
    %v834 = vunpack.c.l.b16 %v742
    %v835 = vunpack.c.l.b16 %v743
    %v836 = vunpack.c.h.b16 %v740
    %v837 = vunpack.c.h.b16 %v741
    %v838 = vunpack.c.h.b16 %v742
    %v839 = vunpack.c.h.b16 %v743
    %v840 = vpack.c.b16 %v777, %v776
    %v841 = vpack.c.b16 %v779, %v778
    %v842 = vpack.c.b16 %v781, %v780
    %v843 = vpack.c.b16 %v783, %v782
    %v844 = vpack.c.b16 %v785, %v784
    %v845 = vpack.c.b16 %v787, %v786
    %v846 = vpack.c.b16 %v789, %v788
    %v847 = vpack.c.b16 %v791, %v790
    %v848 = vpack.c.b16 %v793, %v792
    %v849 = vpack.c.b16 %v795, %v794
    %v850 = vpack.c.b16 %v797, %v796
    %v851 = vpack.c.b16 %v799, %v798
    %v852 = vpack.c.b16 %v801, %v800
    %v853 = vpack.c.b16 %v803, %v802
    %v854 = vpack.c.b16 %v805, %v804
    %v855 = vpack.c.b16 %v807, %v806
    %v856 = vpack.c.b16 %v809, %v808
    %v857 = vpack.c.b16 %v811, %v810
    %v858 = vpack.c.b16 %v813, %v812
    %v859 = vpack.c.b16 %v815, %v814
    %v860 = vpack.c.b16 %v817, %v816
    %v861 = vpack.c.b16 %v819, %v818
    %v862 = vpack.c.b16 %v821, %v820
    %v863 = vpack.c.b16 %v823, %v822
    %v864 = vpack.c.b16 %v825, %v824
    %v865 = vpack.c.b16 %v827, %v826
    %v866 = vpack.c.b16 %v829, %v828
    %v867 = vpack.c.b16 %v831, %v830
    %v868 = vpack.c.b16 %v833, %v832
    %v869 = vpack.c.b16 %v835, %v834
    %v870 = vpack.c.b16 %v837, %v836
    %v871 = vpack.c.b16 %v839, %v838
    %904 = vst [vmem:[#allocation2] sm:$0xff] %v840
    %905 = vst [vmem:[#allocation2 + $0x8] sm:$0xff] %v841
    %906 = vst [vmem:[#allocation2 + $0x10] sm:$0xff] %v842
    %907 = vst [vmem:[#allocation2 + $0x18] sm:$0xff] %v843
    %908 = vst [vmem:[#allocation2 + $0x20] sm:$0xff] %v844
    %909 = vst [vmem:[#allocation2 + $0x28] sm:$0xff] %v845
    %910 = vst [vmem:[#allocation2 + $0x30] sm:$0xff] %v846
    %911 = vst [vmem:[#allocation2 + $0x38] sm:$0xff] %v847
    %912 = vst [vmem:[#allocation2 + $0x40] sm:$0xff] %v848
    %913 = vst [vmem:[#allocation2 + $0x48] sm:$0xff] %v849
    %914 = vst [vmem:[#allocation2 + $0x50] sm:$0xff] %v850
    %915 = vst [vmem:[#allocation2 + $0x58] sm:$0xff] %v851
    %916 = vst [vmem:[#allocation2 + $0x60] sm:$0xff] %v852
    %917 = vst [vmem:[#allocation2 + $0x68] sm:$0xff] %v853
    %918 = vst [vmem:[#allocation2 + $0x70] sm:$0xff] %v854
    %919 = vst [vmem:[#allocation2 + $0x78] sm:$0xff] %v855
    %920 = vst [vmem:[#allocation2 + $0x80] sm:$0xff] %v856
    %921 = vst [vmem:[#allocation2 + $0x88] sm:$0xff] %v857
    %922 = vst [vmem:[#allocation2 + $0x90] sm:$0xff] %v858
    %923 = vst [vmem:[#allocation2 + $0x98] sm:$0xff] %v859
    %924 = vst [vmem:[#allocation2 + $0xa0] sm:$0xff] %v860
    %925 = vst [vmem:[#allocation2 + $0xa8] sm:$0xff] %v861
    %926 = vst [vmem:[#allocation2 + $0xb0] sm:$0xff] %v862
    %927 = vst [vmem:[#allocation2 + $0xb8] sm:$0xff] %v863
    %928 = vst [vmem:[#allocation2 + $0xc0] sm:$0xff] %v864
    %929 = vst [vmem:[#allocation2 + $0xc8] sm:$0xff] %v865
    %930 = vst [vmem:[#allocation2 + $0xd0] sm:$0xff] %v866
    %931 = vst [vmem:[#allocation2 + $0xd8] sm:$0xff] %v867
    %932 = vst [vmem:[#allocation2 + $0xe0] sm:$0xff] %v868
    %933 = vst [vmem:[#allocation2 + $0xe8] sm:$0xff] %v869
    %934 = vst [vmem:[#allocation2 + $0xf0] sm:$0xff] %v870
    %935 = vst [vmem:[#allocation2 + $0xf8] sm:$0xff] %v871
    // Predicated region
    $region18: #{tpu_custom_call.1} parent=1 // pred_check
      _
    $region19: #{tpu_custom_call.1} parent=1 // pred_check_branch
      %937 = sbr.rel (0) target = $region21
    $region20: #{tpu_custom_call.1} parent=1 // pred_region
      %s939 = ssub.s32 4096, 4096
      %940 = vsyncadd [#allocation3], %s939
      %s941 = sshll.u32 [#allocation2], 4
      %s942 = int_to_ptr.vmem [resolvable:$true] %s941
      %947 = dma.vmem_to_hbm [thread:$0]  %s942, 4096, %s4, [#allocation3], 256, 256, 16
    $region21: #{tpu_custom_call.1} parent=1 // pred_fallthru
      _
    // Predicated region
    $region22: #{tpu_custom_call.1} parent=1 // pred_check
      _
    $region23: #{tpu_custom_call.1} parent=1 // pred_check_branch
      %949 = sbr.rel (0) target = $region25
    $region24: #{tpu_custom_call.1} parent=1 // pred_region
      %950 = dma.done [#allocation3], 4096
    $region25: #{tpu_custom_call.1} parent=1 // pred_fallthru
      _
    %951 = vsyncpa [#allocation3], 1

</llo_original>
